<compile_context>
chip_gen: v6e
topology: v6e:2x2x1
jax: 0.10.0
libtpu: 0.0.40
codegen_flags: <defaults>
</compile_context>

<pallas_src>
import functools

import jax
import jax.numpy as jnp
from jax.experimental import pallas as pl
from jax.experimental.pallas import tpu as pltpu


def _round_up(n, m):
    return ((n + m - 1) // m) * m


def snn_kernel(xt_ref, w1_ref, b1_ref, w2_ref, b2_ref, w3_ref, b3_ref, o_ref):
    # Transposed ("batch on lanes") layout: every tensor is (features, TB) with
    # TB a multiple of 128, so intermediates and the output store are lane-dense.
    xt = xt_ref[...]                                                    # (8,  TB) f32
    h1 = jnp.dot(w1_ref[...], xt, preferred_element_type=jnp.float32)   # (32, TB)
    h1 = jnp.maximum(h1 + b1_ref[...], 0.0)
    h2 = jnp.dot(w2_ref[...], h1, preferred_element_type=jnp.float32)   # (64, TB)
    h2 = jnp.maximum(h2 + b2_ref[...], 0.0)
    logits = jnp.dot(w3_ref[...], h2, preferred_element_type=jnp.float32)
    logits = logits + b3_ref[...]                                       # (nc, TB)
    # numerically-stable softmax over the feature (sublane) axis
    m = jnp.max(logits, axis=0, keepdims=True)
    e = jnp.exp(logits - m)
    denom = jnp.sum(e, axis=0, keepdims=True)
    o_ref[...] = (e / denom).astype(o_ref.dtype)


@functools.partial(jax.jit, static_argnames=("tb_max",))
def snn_forward(x, w1, b1, w2, b2, w3, b3, *, tb_max=512):
    B, f_in = x.shape
    n_class = w3.shape[1]

    # Batch tile: lane-dense (multiple of 128), large enough to amortize the
    # per-step grid overhead, tiny vs. VMEM even on v7x (64 MiB).
    tb = min(tb_max, _round_up(B, 128))
    b_pad = _round_up(B, tb)

    # All operands f32.  Batch padding columns are zeros and sliced off after
    # the kernel.
    xt = jnp.zeros((f_in, b_pad), jnp.float32).at[:, :B].set(
        x.T.astype(jnp.float32))
    w1t = w1.T.astype(jnp.float32)                # (32, 8)
    w2t = w2.T.astype(jnp.float32)                # (64, 32)
    w3t = w3.T.astype(jnp.float32)                # (n_class, 64)
    b1c = b1.reshape(-1, 1).astype(jnp.float32)   # (32, 1)
    b2c = b2.reshape(-1, 1).astype(jnp.float32)   # (64, 1)
    b3c = b3.reshape(-1, 1).astype(jnp.float32)   # (n_class, 1)

    const = lambda i: (0, 0)  # whole-array block, stays VMEM-resident across steps

    out_t = pl.pallas_call(
        snn_kernel,
        out_shape=jax.ShapeDtypeStruct((n_class, b_pad), jnp.float32),
        grid=(b_pad // tb,),
        in_specs=[
            pl.BlockSpec((f_in, tb), lambda i: (0, i)),   # x tile: batch on lanes
            pl.BlockSpec(w1t.shape, const),
            pl.BlockSpec(b1c.shape, const),
            pl.BlockSpec(w2t.shape, const),
            pl.BlockSpec(b2c.shape, const),
            pl.BlockSpec(w3t.shape, const),
            pl.BlockSpec(b3c.shape, const),
        ],
        out_specs=pl.BlockSpec((n_class, tb), lambda i: (0, i)),
        compiler_params=pltpu.CompilerParams(
            dimension_semantics=("parallel",),   # independent batch tiles
            vmem_limit_bytes=32 * 1024 * 1024,
        ),
    )(xt, w1t, b1c, w2t, b2c, w3t, b3c)

    # back to the PyTorch layout (B, n_class), dropping batch padding
    return out_t[:, :B].T


def init_params(key, n_class=4):
    # Deterministic init mimicking PyTorch nn.Linear defaults:
    # uniform(-1/sqrt(fan_in), 1/sqrt(fan_in)) for weight and bias.
    dims = [(8, 32), (32, 64), (64, n_class)]
    params = []
    for fan_in, fan_out in dims:
        key, kw, kb = jax.random.split(key, 3)
        bound = 1.0 / jnp.sqrt(float(fan_in))
        w = jax.random.uniform(kw, (fan_in, fan_out), jnp.float32, -bound, bound)
        b = jax.random.uniform(kb, (1, fan_out), jnp.float32, -bound, bound)
        params += [w, b]
    return params


def snn_reference(x, w1, b1, w2, b2, w3, b3):
    h1 = jnp.maximum(x @ w1 + b1, 0.0)
    h2 = jnp.maximum(h1 @ w2 + b2, 0.0)
    return jax.nn.softmax(h2 @ w3 + b3, axis=-1)


if __name__ == "__main__":
    key = jax.random.PRNGKey(0)
    key, kx1, kx2 = jax.random.split(key, 3)
    n_class = 4
    w1, b1, w2, b2, w3, b3 = init_params(key, n_class=n_class)

    def check(x):
        out = jax.block_until_ready(snn_forward(x, w1, b1, w2, b2, w3, b3))
        assert out.shape == (x.shape[0], n_class)
        ref = snn_reference(x, w1, b1, w2, b2, w3, b3)
        assert jnp.allclose(out, ref, atol=1e-5, rtol=1e-5), \
            float(jnp.max(jnp.abs(out - ref)))
        assert jnp.allclose(jnp.sum(out, axis=-1), 1.0, atol=1e-5)

    # small shape consistent with the module (features = 8)
    check(jax.random.normal(kx1, (16, 8), dtype=jnp.float32))
    # larger batch to exercise a multi-step, parallel, pipelined grid
    check(jax.random.normal(kx2, (1024, 8), dtype=jnp.float32))

    print("KERNEL_OK")
</pallas_src>

<mosaic_0001>
module attributes {stable_mosaic.version = 11 : i64} {
  func.func @snn_kernel(%arg0: i32, %arg1: memref<8x128xf32, #tpu.memory_space<vmem>>, %arg2: memref<32x8xf32, #tpu.memory_space<vmem>>, %arg3: memref<32x1xf32, #tpu.memory_space<vmem>>, %arg4: memref<64x32xf32, #tpu.memory_space<vmem>>, %arg5: memref<64x1xf32, #tpu.memory_space<vmem>>, %arg6: memref<4x64xf32, #tpu.memory_space<vmem>>, %arg7: memref<4x1xf32, #tpu.memory_space<vmem>>, %arg8: memref<4x128xf32, #tpu.memory_space<vmem>>) attributes {dimension_semantics = [#tpu.dimension_semantics<parallel>], iteration_bounds = array<i64: 1>, scalar_prefetch = 0 : i64, scratch_operands = 0 : i64, tpu.core_type = #tpu.core_type<tc>, window_params = [{transform_indices = @transform_0, window_bounds = array<i64: 8, 128>}, {pipeline_mode = #tpu.pipeline_mode<synchronous>, transform_indices = @transform_1, window_bounds = array<i64: 32, 8>}, {pipeline_mode = #tpu.pipeline_mode<synchronous>, transform_indices = @transform_2, window_bounds = array<i64: 32, 1>}, {pipeline_mode = #tpu.pipeline_mode<synchronous>, transform_indices = @transform_3, window_bounds = array<i64: 64, 32>}, {pipeline_mode = #tpu.pipeline_mode<synchronous>, transform_indices = @transform_4, window_bounds = array<i64: 64, 1>}, {pipeline_mode = #tpu.pipeline_mode<synchronous>, transform_indices = @transform_5, window_bounds = array<i64: 4, 64>}, {pipeline_mode = #tpu.pipeline_mode<synchronous>, transform_indices = @transform_6, window_bounds = array<i64: 4, 1>}, {transform_indices = @transform_7, window_bounds = array<i64: 4, 128>}]} {
    %c0 = arith.constant 0 : index
    %c0_0 = arith.constant 0 : index
    %0 = vector.load %arg1[%c0, %c0_0] : memref<8x128xf32, #tpu.memory_space<vmem>>, vector<8x128xf32>
    %c0_1 = arith.constant 0 : index
    %c0_2 = arith.constant 0 : index
    %1 = vector.load %arg2[%c0_1, %c0_2] : memref<32x8xf32, #tpu.memory_space<vmem>>, vector<32x8xf32>
    %cst = arith.constant dense<0.000000e+00> : vector<32x128xf32>
    %2 = tpu.matmul %1, %0, %cst {dimension_numbers = #tpu.dot_dimension_numbers<[1], [0], [0], [1], [0, 0, 1, 1], [], []>} : vector<32x8xf32>, vector<8x128xf32>, vector<32x128xf32> -> vector<32x128xf32>
    %c0_3 = arith.constant 0 : index
    %c0_4 = arith.constant 0 : index
    %3 = vector.load %arg3[%c0_3, %c0_4] : memref<32x1xf32, #tpu.memory_space<vmem>>, vector<32x1xf32>
    %4 = vector.broadcast %3 : vector<32x1xf32> to vector<32x128xf32>
    %5 = arith.addf %2, %4 : vector<32x128xf32>
    %cst_5 = arith.constant 0.000000e+00 : f32
    %6 = vector.broadcast %cst_5 : f32 to vector<32x128xf32>
    %7 = arith.maximumf %5, %6 : vector<32x128xf32>
    %c0_6 = arith.constant 0 : index
    %c0_7 = arith.constant 0 : index
    %8 = vector.load %arg4[%c0_6, %c0_7] : memref<64x32xf32, #tpu.memory_space<vmem>>, vector<64x32xf32>
    %cst_8 = arith.constant dense<0.000000e+00> : vector<64x128xf32>
    %9 = tpu.matmul %8, %7, %cst_8 {dimension_numbers = #tpu.dot_dimension_numbers<[1], [0], [0], [1], [0, 0, 1, 1], [], []>} : vector<64x32xf32>, vector<32x128xf32>, vector<64x128xf32> -> vector<64x128xf32>
    %c0_9 = arith.constant 0 : index
    %c0_10 = arith.constant 0 : index
    %10 = vector.load %arg5[%c0_9, %c0_10] : memref<64x1xf32, #tpu.memory_space<vmem>>, vector<64x1xf32>
    %11 = vector.broadcast %10 : vector<64x1xf32> to vector<64x128xf32>
    %12 = arith.addf %9, %11 : vector<64x128xf32>
    %cst_11 = arith.constant 0.000000e+00 : f32
    %13 = vector.broadcast %cst_11 : f32 to vector<64x128xf32>
    %14 = arith.maximumf %12, %13 : vector<64x128xf32>
    %c0_12 = arith.constant 0 : index
    %c0_13 = arith.constant 0 : index
    %15 = vector.load %arg6[%c0_12, %c0_13] : memref<4x64xf32, #tpu.memory_space<vmem>>, vector<4x64xf32>
    %cst_14 = arith.constant dense<0.000000e+00> : vector<4x128xf32>
    %16 = tpu.matmul %15, %14, %cst_14 {dimension_numbers = #tpu.dot_dimension_numbers<[1], [0], [0], [1], [0, 0, 1, 1], [], []>} : vector<4x64xf32>, vector<64x128xf32>, vector<4x128xf32> -> vector<4x128xf32>
    %c0_15 = arith.constant 0 : index
    %c0_16 = arith.constant 0 : index
    %17 = vector.load %arg7[%c0_15, %c0_16] : memref<4x1xf32, #tpu.memory_space<vmem>>, vector<4x1xf32>
    %18 = vector.broadcast %17 : vector<4x1xf32> to vector<4x128xf32>
    %19 = arith.addf %16, %18 : vector<4x128xf32>
    %cst_17 = arith.constant dense<0xFF800000> : vector<128xf32>
    %20 = vector.multi_reduction <maximumf>, %19, %cst_17 [0] : vector<4x128xf32> to vector<128xf32>
    %21 = vector.shape_cast %20 : vector<128xf32> to vector<1x128xf32>
    %22 = vector.broadcast %21 : vector<1x128xf32> to vector<4x128xf32>
    %23 = arith.subf %19, %22 : vector<4x128xf32>
    %24 = math.exp %23 : vector<4x128xf32>
    %cst_18 = arith.constant dense<0.000000e+00> : vector<128xf32>
    %25 = vector.multi_reduction <add>, %24, %cst_18 [0] : vector<4x128xf32> to vector<128xf32>
    %26 = vector.shape_cast %25 : vector<128xf32> to vector<1x128xf32>
    %27 = vector.broadcast %26 : vector<1x128xf32> to vector<4x128xf32>
    %28 = arith.divf %24, %27 : vector<4x128xf32>
    %c0_19 = arith.constant 0 : index
    %c0_20 = arith.constant 0 : index
    %29 = vector.load %arg8[%c0_19, %c0_20] : memref<4x128xf32, #tpu.memory_space<vmem>>, vector<4x128xf32>
    tpu.vector_store %arg8[%c0_19, %c0_20], %28 {strides = array<i32>} : memref<4x128xf32, #tpu.memory_space<vmem>>, vector<4x128xf32>,
    return
  }
  func.func @transform_0(%arg0: i32) -> (i32, i32) {
    %c0_i32 = arith.constant 0 : i32
    %c0_i32_0 = arith.constant 0 : i32
    return %c0_i32, %arg0 : i32, i32
  }
  func.func @transform_1(%arg0: i32) -> (i32, i32) {
    %c0_i32 = arith.constant 0 : i32
    %c0_i32_0 = arith.constant 0 : i32
    %c0_i32_1 = arith.constant 0 : i32
    return %c0_i32, %c0_i32_0 : i32, i32
  }
  func.func @transform_2(%arg0: i32) -> (i32, i32) {
    %c0_i32 = arith.constant 0 : i32
    %c0_i32_0 = arith.constant 0 : i32
    %c0_i32_1 = arith.constant 0 : i32
    return %c0_i32, %c0_i32_0 : i32, i32
  }
  func.func @transform_3(%arg0: i32) -> (i32, i32) {
    %c0_i32 = arith.constant 0 : i32
    %c0_i32_0 = arith.constant 0 : i32
    %c0_i32_1 = arith.constant 0 : i32
    return %c0_i32, %c0_i32_0 : i32, i32
  }
  func.func @transform_4(%arg0: i32) -> (i32, i32) {
    %c0_i32 = arith.constant 0 : i32
    %c0_i32_0 = arith.constant 0 : i32
    %c0_i32_1 = arith.constant 0 : i32
    return %c0_i32, %c0_i32_0 : i32, i32
  }
  func.func @transform_5(%arg0: i32) -> (i32, i32) {
    %c0_i32 = arith.constant 0 : i32
    %c0_i32_0 = arith.constant 0 : i32
    %c0_i32_1 = arith.constant 0 : i32
    return %c0_i32, %c0_i32_0 : i32, i32
  }
  func.func @transform_6(%arg0: i32) -> (i32, i32) {
    %c0_i32 = arith.constant 0 : i32
    %c0_i32_0 = arith.constant 0 : i32
    %c0_i32_1 = arith.constant 0 : i32
    return %c0_i32, %c0_i32_0 : i32, i32
  }
  func.func @transform_7(%arg0: i32) -> (i32, i32) {
    %c0_i32 = arith.constant 0 : i32
    %c0_i32_0 = arith.constant 0 : i32
    return %c0_i32, %arg0 : i32, i32
  }
}

</mosaic_0001>

<llo_original>
// kernel: snn_forward.1
$region0: #{snn_forward.1}
  #allocation0 [shape = 'u32[]', space=smem, size = 0x4, offset = 0x4, fixed_abs, tag = 'smem constant byte address 0x4 - core index']
  #allocation1 [shape = 'u32[144,128]{1,0:T(1,128)}', space=vmem, size = 0x12000, scoped, tag = 'internal scratch']
  %s0 = inlined_call_operand.vmem [shape: f32[8,128], index: 0, kind: input, shape index: {}]
  %s1 = inlined_call_operand.vmem [shape: f32[32,8], index: 1, kind: input, shape index: {}]
  %s2 = inlined_call_operand.vmem [shape: f32[32,1], index: 2, kind: input, shape index: {}]
  %s3 = inlined_call_operand.vmem [shape: f32[64,32], index: 3, kind: input, shape index: {}]
  %s4 = inlined_call_operand.vmem [shape: f32[64,1], index: 4, kind: input, shape index: {}]
  %s5 = inlined_call_operand.vmem [shape: f32[4,64], index: 5, kind: input, shape index: {}]
  %s6 = inlined_call_operand.vmem [shape: f32[4,1], index: 6, kind: input, shape index: {}]
  %s7 = inlined_call_operand.vmem [shape: f32[4,128], index: 7, kind: output, shape index: {}]
  %s8 = sld [smem:[#allocation0]]
  $region38: #{snn_forward.1} parent=0
    _
  %s10 = ssub.s32 1, %s8
  %s11 = scalar_select 0, %s10, %s8
  // Predicated region
  $region2: #{snn_forward.1} parent=0 // pred_check
    _
  $region3: #{snn_forward.1} parent=0 // pred_check_branch
    %13 = sbr.rel (0) target = $region5
  $region4: #{snn_forward.1} parent=0 // pred_region
    _
  $region5: #{snn_forward.1} parent=0 // pred_fallthru
    _
  // Predicated region
  $region6: #{snn_forward.1} parent=0 // pred_check
    _
  $region7: #{snn_forward.1} parent=0 // pred_check_branch
    %15 = sbr.rel (0) target = $region9
  $region8: #{snn_forward.1} parent=0 // pred_region
    _
  $region9: #{snn_forward.1} parent=0 // pred_fallthru
    _
  // Predicated region
  $region10: #{snn_forward.1} parent=0 // pred_check
    _
  $region11: #{snn_forward.1} parent=0 // pred_check_branch
    %17 = sbr.rel (0) target = $region13
  $region12: #{snn_forward.1} parent=0 // pred_region
    _
  $region13: #{snn_forward.1} parent=0 // pred_fallthru
    _
  // Predicated region
  $region14: #{snn_forward.1} parent=0 // pred_check
    _
  $region15: #{snn_forward.1} parent=0 // pred_check_branch
    %19 = sbr.rel (0) target = $region17
  $region16: #{snn_forward.1} parent=0 // pred_region
    _
  $region17: #{snn_forward.1} parent=0 // pred_fallthru
    _
  // Predicated region
  $region18: #{snn_forward.1} parent=0 // pred_check
    _
  $region19: #{snn_forward.1} parent=0 // pred_check_branch
    %21 = sbr.rel (0) target = $region21
  $region20: #{snn_forward.1} parent=0 // pred_region
    _
  $region21: #{snn_forward.1} parent=0 // pred_fallthru
    _
  // Predicated region
  $region22: #{snn_forward.1} parent=0 // pred_check
    _
  $region23: #{snn_forward.1} parent=0 // pred_check_branch
    %23 = sbr.rel (0) target = $region25
  $region24: #{snn_forward.1} parent=0 // pred_region
    _
  $region25: #{snn_forward.1} parent=0 // pred_fallthru
    _
  // Predicated region
  $region26: #{snn_forward.1} parent=0 // pred_check
    _
  $region27: #{snn_forward.1} parent=0 // pred_check_branch
    %25 = sbr.rel (0) target = $region29
  $region28: #{snn_forward.1} parent=0 // pred_region
    _
  $region29: #{snn_forward.1} parent=0 // pred_fallthru
    _
  %v26 = vld [vmem:[%s0] sm:$0xff]
  %v27 = vld [vmem:[%s1] sm:$0xff]
  %v28 = vld [vmem:[%s1 + $0x8] sm:$0xff]
  %v29 = vld [vmem:[%s1 + $0x10] sm:$0xff]
  %v30 = vld [vmem:[%s1 + $0x18] sm:$0xff]
  %v31 = vld [vmem:[%s2] sm:$0xff]
  %v32 = vld [vmem:[%s2 + $0x8] sm:$0xff]
  %v33 = vld [vmem:[%s2 + $0x10] sm:$0xff]
  %v34 = vld [vmem:[%s2 + $0x18] sm:$0xff]
  %36 = vset.pattern.permute.xlu0 0
  %37 = vperm.xlu0 %36, %v31
  %v38 = vpop.permute.xlu0 %37
  %41 = vset.pattern.permute.xlu0 0
  %42 = vperm.xlu0 %41, %v32
  %v43 = vpop.permute.xlu0 %42
  %46 = vset.pattern.permute.xlu0 0
  %47 = vperm.xlu0 %46, %v33
  %v48 = vpop.permute.xlu0 %47
  %51 = vset.pattern.permute.xlu0 0
  %52 = vperm.xlu0 %51, %v34
  %v53 = vpop.permute.xlu0 %52
  %vm55 = vcmask 64512
  %v57 = vsel %vm55, %v27, 0
  %v60 = vsel %vm55, %v28, 0
  %v63 = vsel %vm55, %v29, 0
  %v66 = vsel %vm55, %v30, 0
  %68 = vmatprep.subr.mxu0 0.0
  %69 = vmatpush1.msra.mxu0 0.0
  %70 = vmatprep.subr.mxu0 0.0
  %71 = vmatpush1.msra.mxu0 0.0
  %72 = vmatprep.subr.mxu0 0.0
  %73 = vmatpush1.msra.mxu0 0.0
  %74 = vmatprep.subr.mxu0 0.0
  %75 = vmatpush1.msra.mxu0 0.0
  %76 = vmatprep.subr.mxu0 0.0
  %77 = vmatpush1.msra.mxu0 0.0
  %78 = vmatprep.subr.mxu0 0.0
  %79 = vmatpush1.msra.mxu0 0.0
  %80 = vmatprep.subr.mxu0 0.0
  %81 = vmatpush1.msra.mxu0 0.0
  %82 = vmatprep.subr.mxu0 0.0
  %83 = vmatpush1.msra.mxu0 0.0
  %84 = vmatprep.subr.mxu0 0.0
  %85 = vmatpush1.msra.mxu0 0.0
  %86 = vmatprep.subr.mxu0 0.0
  %87 = vmatpush1.msra.mxu0 0.0
  %88 = vmatprep.subr.mxu0 0.0
  %89 = vmatpush1.msra.mxu0 0.0
  %90 = vmatprep.subr.mxu0 0.0
  %91 = vmatpush1.msra.mxu0 0.0
  %92 = vmatprep.subr.mxu0 0.0
  %93 = vmatpush1.msra.mxu0 0.0
  %94 = vmatprep.subr.mxu0 0.0
  %95 = vmatpush1.msra.mxu0 0.0
  %96 = vmatprep.subr.mxu0 0.0
  %97 = vmatpush1.msra.mxu0 0.0
  %98 = vmatprep.subr.mxu0 0.0
  %99 = vmatpush1.msra.mxu0 %v26
  %100 = vmatprep.subr.mxu0 0.0
  %101 = vmatpush2.msra.mxu0 0.0
  %102 = vmatprep.subr.mxu0 0.0
  %103 = vmatpush2.msra.mxu0 0.0
  %104 = vmatprep.subr.mxu0 0.0
  %105 = vmatpush2.msra.mxu0 0.0
  %106 = vmatprep.subr.mxu0 0.0
  %107 = vmatpush2.msra.mxu0 0.0
  %108 = vmatprep.subr.mxu0 0.0
  %109 = vmatpush2.msra.mxu0 0.0
  %110 = vmatprep.subr.mxu0 0.0
  %111 = vmatpush2.msra.mxu0 0.0
  %112 = vmatprep.subr.mxu0 0.0
  %113 = vmatpush2.msra.mxu0 0.0
  %114 = vmatprep.subr.mxu0 0.0
  %115 = vmatpush2.msra.mxu0 0.0
  %116 = vmatprep.subr.mxu0 0.0
  %117 = vmatpush2.msra.mxu0 0.0
  %118 = vmatprep.subr.mxu0 0.0
  %119 = vmatpush2.msra.mxu0 0.0
  %120 = vmatprep.subr.mxu0 0.0
  %121 = vmatpush2.msra.mxu0 0.0
  %122 = vmatprep.subr.mxu0 0.0
  %123 = vmatpush2.msra.mxu0 0.0
  %124 = vmatprep.subr.mxu0 0.0
  %125 = vmatpush2.msra.mxu0 0.0
  %126 = vmatprep.subr.mxu0 0.0
  %127 = vmatpush2.msra.mxu0 0.0
  %128 = vmatprep.subr.mxu0 0.0
  %129 = vmatpush2.msra.mxu0 0.0
  %130 = vmatprep.subr.mxu0 0.0
  %131 = vmatpush2.msra.mxu0 0.0
  %132 = vmatprep.mubr.f32.mxu0 0.0
  %133 = vmatmul.mubr.f32.gmra.mxu0 %v57
  %v134 = vpop.f32.mrf.mxu0
  %v135 = vadd.f32 %v38, %v134
  %v136 = vpop.f32.mrf.mxu0
  %137 = vmatprep.mubr.f32.mxu0 0.0
  %138 = vmatmul.mubr.f32.gmra.mxu0 %v60
  %v139 = vpop.f32.mrf.mxu0
  %v140 = vadd.f32 %v43, %v139
  %v141 = vpop.f32.mrf.mxu0
  %142 = vmatprep.mubr.f32.mxu0 0.0
  %143 = vmatmul.mubr.f32.gmra.mxu0 %v63
  %v144 = vpop.f32.mrf.mxu0
  %v145 = vadd.f32 %v48, %v144
  %v146 = vpop.f32.mrf.mxu0
  %147 = vmatprep.mubr.f32.mxu0 0.0
  %148 = vmatmul.mubr.f32.gmra.mxu0 %v66
  %v149 = vpop.f32.mrf.mxu0
  %v150 = vadd.f32 %v53, %v149
  %v151 = vpop.f32.mrf.mxu0
  %152 = vdwg.mxu0
  %v153 = vmax.f32 %v135, 0.0
  %v154 = vmax.f32 %v140, 0.0
  %v155 = vmax.f32 %v145, 0.0
  %v156 = vmax.f32 %v150, 0.0
  %v157 = vld [vmem:[%s3] sm:$0xff]
  %v158 = vld [vmem:[%s3 + $0x8] sm:$0xff]
  %v159 = vld [vmem:[%s3 + $0x10] sm:$0xff]
  %v160 = vld [vmem:[%s3 + $0x18] sm:$0xff]
  %v161 = vld [vmem:[%s3 + $0x20] sm:$0xff]
  %v162 = vld [vmem:[%s3 + $0x28] sm:$0xff]
  %v163 = vld [vmem:[%s3 + $0x30] sm:$0xff]
  %v164 = vld [vmem:[%s3 + $0x38] sm:$0xff]
  %v165 = vld [vmem:[%s4] sm:$0xff]
  %v166 = vld [vmem:[%s4 + $0x8] sm:$0xff]
  %v167 = vld [vmem:[%s4 + $0x10] sm:$0xff]
  %v168 = vld [vmem:[%s4 + $0x18] sm:$0xff]
  %v169 = vld [vmem:[%s4 + $0x20] sm:$0xff]
  %v170 = vld [vmem:[%s4 + $0x28] sm:$0xff]
  %v171 = vld [vmem:[%s4 + $0x30] sm:$0xff]
  %v172 = vld [vmem:[%s4 + $0x38] sm:$0xff]
  %174 = vset.pattern.permute.xlu0 0
  %175 = vperm.xlu0 %174, %v165
  %v176 = vpop.permute.xlu0 %175
  %179 = vset.pattern.permute.xlu0 0
  %180 = vperm.xlu0 %179, %v166
  %v181 = vpop.permute.xlu0 %180
  %184 = vset.pattern.permute.xlu0 0
  %185 = vperm.xlu0 %184, %v167
  %v186 = vpop.permute.xlu0 %185
  %189 = vset.pattern.permute.xlu0 0
  %190 = vperm.xlu0 %189, %v168
  %v191 = vpop.permute.xlu0 %190
  %194 = vset.pattern.permute.xlu0 0
  %195 = vperm.xlu0 %194, %v169
  %v196 = vpop.permute.xlu0 %195
  %199 = vset.pattern.permute.xlu0 0
  %200 = vperm.xlu0 %199, %v170
  %v201 = vpop.permute.xlu0 %200
  %204 = vset.pattern.permute.xlu0 0
  %205 = vperm.xlu0 %204, %v171
  %v206 = vpop.permute.xlu0 %205
  %209 = vset.pattern.permute.xlu0 0
  %210 = vperm.xlu0 %209, %v172
  %v211 = vpop.permute.xlu0 %210
  %vm213 = vcmask 261120
  %v215 = vsel %vm213, %v157, 0
  %v218 = vsel %vm213, %v158, 0
  %v221 = vsel %vm213, %v159, 0
  %v224 = vsel %vm213, %v160, 0
  %v227 = vsel %vm213, %v161, 0
  %v230 = vsel %vm213, %v162, 0
  %v233 = vsel %vm213, %v163, 0
  %v236 = vsel %vm213, %v164, 0
  %238 = vmatprep.subr.mxu0 0.0
  %239 = vmatpush1.msra.mxu0 0.0
  %240 = vmatprep.subr.mxu0 0.0
  %241 = vmatpush1.msra.mxu0 0.0
  %242 = vmatprep.subr.mxu0 0.0
  %243 = vmatpush1.msra.mxu0 0.0
  %244 = vmatprep.subr.mxu0 0.0
  %245 = vmatpush1.msra.mxu0 0.0
  %246 = vmatprep.subr.mxu0 0.0
  %247 = vmatpush1.msra.mxu0 0.0
  %248 = vmatprep.subr.mxu0 0.0
  %249 = vmatpush1.msra.mxu0 0.0
  %250 = vmatprep.subr.mxu0 0.0
  %251 = vmatpush1.msra.mxu0 0.0
  %252 = vmatprep.subr.mxu0 0.0
  %253 = vmatpush1.msra.mxu0 0.0
  %254 = vmatprep.subr.mxu0 0.0
  %255 = vmatpush1.msra.mxu0 0.0
  %256 = vmatprep.subr.mxu0 0.0
  %257 = vmatpush1.msra.mxu0 0.0
  %258 = vmatprep.subr.mxu0 0.0
  %259 = vmatpush1.msra.mxu0 0.0
  %260 = vmatprep.subr.mxu0 0.0
  %261 = vmatpush1.msra.mxu0 0.0
  %262 = vmatprep.subr.mxu0 0.0
  %263 = vmatpush1.msra.mxu0 %v156
  %264 = vmatprep.subr.mxu0 0.0
  %265 = vmatpush1.msra.mxu0 %v155
  %266 = vmatprep.subr.mxu0 0.0
  %267 = vmatpush1.msra.mxu0 %v154
  %268 = vmatprep.subr.mxu0 0.0
  %269 = vmatpush1.msra.mxu0 %v153
  %270 = vmatprep.subr.mxu0 0.0
  %271 = vmatpush2.msra.mxu0 0.0
  %272 = vmatprep.subr.mxu0 0.0
  %273 = vmatpush2.msra.mxu0 0.0
  %274 = vmatprep.subr.mxu0 0.0
  %275 = vmatpush2.msra.mxu0 0.0
  %276 = vmatprep.subr.mxu0 0.0
  %277 = vmatpush2.msra.mxu0 0.0
  %278 = vmatprep.subr.mxu0 0.0
  %279 = vmatpush2.msra.mxu0 0.0
  %280 = vmatprep.subr.mxu0 0.0
  %281 = vmatpush2.msra.mxu0 0.0
  %282 = vmatprep.subr.mxu0 0.0
  %283 = vmatpush2.msra.mxu0 0.0
  %284 = vmatprep.subr.mxu0 0.0
  %285 = vmatpush2.msra.mxu0 0.0
  %286 = vmatprep.subr.mxu0 0.0
  %287 = vmatpush2.msra.mxu0 0.0
  %288 = vmatprep.subr.mxu0 0.0
  %289 = vmatpush2.msra.mxu0 0.0
  %290 = vmatprep.subr.mxu0 0.0
  %291 = vmatpush2.msra.mxu0 0.0
  %292 = vmatprep.subr.mxu0 0.0
  %293 = vmatpush2.msra.mxu0 0.0
  %294 = vmatprep.subr.mxu0 0.0
  %295 = vmatpush2.msra.mxu0 0.0
  %296 = vmatprep.subr.mxu0 0.0
  %297 = vmatpush2.msra.mxu0 0.0
  %298 = vmatprep.subr.mxu0 0.0
  %299 = vmatpush2.msra.mxu0 0.0
  %300 = vmatprep.subr.mxu0 0.0
  %301 = vmatpush2.msra.mxu0 0.0
  %302 = vmatprep.mubr.f32.mxu0 0.0
  %303 = vmatmul.mubr.f32.gmra.mxu0 %v215
  %v304 = vpop.f32.mrf.mxu0
  %v305 = vadd.f32 %v176, %v304
  %v306 = vpop.f32.mrf.mxu0
  %307 = vmatprep.mubr.f32.mxu0 0.0
  %308 = vmatmul.mubr.f32.gmra.mxu0 %v218
  %v309 = vpop.f32.mrf.mxu0
  %v310 = vadd.f32 %v181, %v309
  %v311 = vpop.f32.mrf.mxu0
  %312 = vmatprep.mubr.f32.mxu0 0.0
  %313 = vmatmul.mubr.f32.gmra.mxu0 %v221
  %v314 = vpop.f32.mrf.mxu0
  %v315 = vadd.f32 %v186, %v314
  %v316 = vpop.f32.mrf.mxu0
  %317 = vmatprep.mubr.f32.mxu0 0.0
  %318 = vmatmul.mubr.f32.gmra.mxu0 %v224
  %v319 = vpop.f32.mrf.mxu0
  %v320 = vadd.f32 %v191, %v319
  %v321 = vpop.f32.mrf.mxu0
  %322 = vmatprep.mubr.f32.mxu0 0.0
  %323 = vmatmul.mubr.f32.gmra.mxu0 %v227
  %v324 = vpop.f32.mrf.mxu0
  %v325 = vadd.f32 %v196, %v324
  %v326 = vpop.f32.mrf.mxu0
  %327 = vmatprep.mubr.f32.mxu0 0.0
  %328 = vmatmul.mubr.f32.gmra.mxu0 %v230
  %v329 = vpop.f32.mrf.mxu0
  %v330 = vadd.f32 %v201, %v329
  %v331 = vpop.f32.mrf.mxu0
  %332 = vmatprep.mubr.f32.mxu0 0.0
  %333 = vmatmul.mubr.f32.gmra.mxu0 %v233
  %v334 = vpop.f32.mrf.mxu0
  %v335 = vadd.f32 %v206, %v334
  %v336 = vpop.f32.mrf.mxu0
  %337 = vmatprep.mubr.f32.mxu0 0.0
  %338 = vmatmul.mubr.f32.gmra.mxu0 %v236
  %v339 = vpop.f32.mrf.mxu0
  %v340 = vadd.f32 %v211, %v339
  %v341 = vpop.f32.mrf.mxu0
  %342 = vdwg.mxu0
  %v343 = vmax.f32 %v305, 0.0
  %v344 = vmax.f32 %v310, 0.0
  %v345 = vmax.f32 %v315, 0.0
  %v346 = vmax.f32 %v320, 0.0
  %v347 = vmax.f32 %v325, 0.0
  %v348 = vmax.f32 %v330, 0.0
  %v349 = vmax.f32 %v335, 0.0
  %v350 = vmax.f32 %v340, 0.0
  %v351 = vld [vmem:[%s5] sm:$0xf]
  %v352 = vld [vmem:[%s6] sm:$0xf]
  %354 = vset.pattern.permute.xlu0 0
  %355 = vperm.xlu0 %354, %v352
  %v356 = vpop.permute.xlu0 %355
  %vm358 = vcmask 523264
  %v360 = vsel %vm358, %v351, 0
  %362 = vmatprep.subr.mxu0 0.0
  %363 = vmatpush1.msra.mxu0 0.0
  %364 = vmatprep.subr.mxu0 0.0
  %365 = vmatpush1.msra.mxu0 0.0
  %366 = vmatprep.subr.mxu0 0.0
  %367 = vmatpush1.msra.mxu0 0.0
  %368 = vmatprep.subr.mxu0 0.0
  %369 = vmatpush1.msra.mxu0 0.0
  %370 = vmatprep.subr.mxu0 0.0
  %371 = vmatpush1.msra.mxu0 0.0
  %372 = vmatprep.subr.mxu0 0.0
  %373 = vmatpush1.msra.mxu0 0.0
  %374 = vmatprep.subr.mxu0 0.0
  %375 = vmatpush1.msra.mxu0 0.0
  %376 = vmatprep.subr.mxu0 0.0
  %377 = vmatpush1.msra.mxu0 0.0
  %378 = vmatprep.subr.mxu0 0.0
  %379 = vmatpush1.msra.mxu0 %v350
  %380 = vmatprep.subr.mxu0 0.0
  %381 = vmatpush1.msra.mxu0 %v349
  %382 = vmatprep.subr.mxu0 0.0
  %383 = vmatpush1.msra.mxu0 %v348
  %384 = vmatprep.subr.mxu0 0.0
  %385 = vmatpush1.msra.mxu0 %v347
  %386 = vmatprep.subr.mxu0 0.0
  %387 = vmatpush1.msra.mxu0 %v346
  %388 = vmatprep.subr.mxu0 0.0
  %389 = vmatpush1.msra.mxu0 %v345
  %390 = vmatprep.subr.mxu0 0.0
  %391 = vmatpush1.msra.mxu0 %v344
  %392 = vmatprep.subr.mxu0 0.0
  %393 = vmatpush1.msra.mxu0 %v343
  %394 = vmatprep.subr.mxu0 0.0
  %395 = vmatpush2.msra.mxu0 0.0
  %396 = vmatprep.subr.mxu0 0.0
  %397 = vmatpush2.msra.mxu0 0.0
  %398 = vmatprep.subr.mxu0 0.0
  %399 = vmatpush2.msra.mxu0 0.0
  %400 = vmatprep.subr.mxu0 0.0
  %401 = vmatpush2.msra.mxu0 0.0
  %402 = vmatprep.subr.mxu0 0.0
  %403 = vmatpush2.msra.mxu0 0.0
  %404 = vmatprep.subr.mxu0 0.0
  %405 = vmatpush2.msra.mxu0 0.0
  %406 = vmatprep.subr.mxu0 0.0
  %407 = vmatpush2.msra.mxu0 0.0
  %408 = vmatprep.subr.mxu0 0.0
  %409 = vmatpush2.msra.mxu0 0.0
  %410 = vmatprep.subr.mxu0 0.0
  %411 = vmatpush2.msra.mxu0 0.0
  %412 = vmatprep.subr.mxu0 0.0
  %413 = vmatpush2.msra.mxu0 0.0
  %414 = vmatprep.subr.mxu0 0.0
  %415 = vmatpush2.msra.mxu0 0.0
  %416 = vmatprep.subr.mxu0 0.0
  %417 = vmatpush2.msra.mxu0 0.0
  %418 = vmatprep.subr.mxu0 0.0
  %419 = vmatpush2.msra.mxu0 0.0
  %420 = vmatprep.subr.mxu0 0.0
  %421 = vmatpush2.msra.mxu0 0.0
  %422 = vmatprep.subr.mxu0 0.0
  %423 = vmatpush2.msra.mxu0 0.0
  %424 = vmatprep.subr.mxu0 0.0
  %425 = vmatpush2.msra.mxu0 0.0
  %426 = vmatprep.mubr.f32.mxu0 0.0
  %427 = vmatmul.mubr.f32.gmra.mxu0 %v360
  %v428 = vpop.f32.mrf.mxu0
  %v429 = vadd.f32 %v356, %v428
  %v430 = vpop.f32.mrf.mxu0
  %431 = vdwg.mxu0
  %vm432 = vcmask 1043456
  %v433 = vsel %vm432, %v429, -inf
  %v434 = vrot.slane %v433, 4
  %v435 = vmax.f32 %v433, %v434
  %v436 = vrot.slane %v435, 2
  %v437 = vmax.f32 %v435, %v436
  %v438 = vrot.slane %v437, 1
  %v439 = vmax.f32 %v437, %v438
  %v440 = vsub.f32 %v429, %v439
  %v441 = vmul.f32 %v440, 1.442695
  %v442 = vpow.pop %v441
  %v443 = vsel %vm432, %v442, 0.0
  %v444 = vrot.slane %v443, 4
  %v445 = vadd.f32 %v443, %v444
  %v446 = vrot.slane %v445, 2
  %v447 = vadd.f32 %v445, %v446
  %v448 = vrot.slane %v447, 1
  %v449 = vadd.f32 %v447, %v448
  %v450 = vrcp.pop %v449
  %v451 = vmul.f32 %v442, %v450
  %452 = vst [vmem:[%s7] sm:$0xf] %v451
  // Predicated region
  $region30: #{snn_forward.1} parent=0 // pred_check
    _
  $region31: #{snn_forward.1} parent=0 // pred_check_branch
    %454 = sbr.rel (0) target = $region33
  $region32: #{snn_forward.1} parent=0 // pred_region
    _
  $region33: #{snn_forward.1} parent=0 // pred_fallthru
    _
  // Predicated region
  $region34: #{snn_forward.1} parent=0 // pred_check
    _
  $region35: #{snn_forward.1} parent=0 // pred_check_branch
    %456 = sbr.rel (0) target = $region37
  $region36: #{snn_forward.1} parent=0 // pred_region
    _
  $region37: #{snn_forward.1} parent=0 // pred_fallthru
    _

</llo_original>
